<compile_context>
chip_gen: v7x
topology: tpu7x:2x2x1
jax: 0.10.0
libtpu: 0.0.40
codegen_flags: <defaults>
</compile_context>

<pallas_src>
import functools

import jax
import jax.numpy as jnp
from jax import lax
from jax.experimental import pallas as pl
from jax.experimental.pallas import tpu as pltpu

_EPS = 1e-8
_CLIP = 20.0


def _round_up(x, m):
    return (x + m - 1) // m * m


def _choose_tiles(n_real):
    if n_real > 512:
        tq, tk = 256, 512
        n_pad = _round_up(n_real, 512)   # multiple of both tq and tk
    else:
        n_pad = _round_up(n_real, 128)
        tq = tk = n_pad
    return tq, tk, n_pad


# ---------------------------------------------------------------------------
# Stage 1: L2-normalize rows (eps=1e-8, like F.normalize) and fold in
#          1/sqrt(temperature), so the NT matmul of the result with itself
#          directly yields sim / temperature.  Output dtype = MXU dtype.
# ---------------------------------------------------------------------------
def _normalize_kernel(x_ref, y_ref, *, inv_sqrt_temp):
    x = x_ref[...].astype(jnp.float32)
    ssq = jnp.sum(x * x, axis=1, keepdims=True)
    # 1/max(||x||, eps) == rsqrt(max(||x||^2, eps^2)); rsqrt runs on the EUP.
    inv = lax.rsqrt(jnp.maximum(ssq, _EPS * _EPS))
    y_ref[...] = (x * (inv * inv_sqrt_temp)).astype(y_ref.dtype)


# ---------------------------------------------------------------------------
# Stage 2: streamed SupCon reduction over (row-block, col-block) tiles.
# ---------------------------------------------------------------------------
def _supcon_tile(pos_weight_fn, a_ref, b_ref, out_ref,
                 sum_exp, sum_pos_sim, sum_pos,
                 *, tq, tk, n_real, loss_scale):
    i = pl.program_id(0)
    j = pl.program_id(1)

    @pl.when(j == 0)
    def _init():
        sum_exp[...] = jnp.zeros_like(sum_exp)
        sum_pos_sim[...] = jnp.zeros_like(sum_pos_sim)
        sum_pos[...] = jnp.zeros_like(sum_pos)

    # [tq, tk] tile of (f_i . f_j)/T on the MXU (NT contraction, f32 acc).
    sim = lax.dot_general(a_ref[...], b_ref[...],
                          (((1,), (1,)), ((), ())),
                          preferred_element_type=jnp.float32)
    sim = jnp.clip(sim, -_CLIP, _CLIP)

    row_ids = i * tq + lax.broadcasted_iota(jnp.int32, (tq, tk), 0)
    col_ids = j * tk + lax.broadcasted_iota(jnp.int32, (tq, tk), 1)
    # logits_mask (no self-contrast) & padded-column validity, built in-tile.
    denom_m = (col_ids < n_real) & (row_ids != col_ids)

    pos_w = jnp.where(denom_m, pos_weight_fn(), 0.0)

    sum_exp[...] += jnp.sum(jnp.where(denom_m, jnp.exp(sim), 0.0),
                            axis=1, keepdims=True)
    sum_pos_sim[...] += jnp.sum(pos_w * sim, axis=1, keepdims=True)
    sum_pos[...] += jnp.sum(pos_w, axis=1, keepdims=True)

    @pl.when(j == pl.num_programs(1) - 1)
    def _finalize():
        log_denom = jnp.log(sum_exp[...] + _EPS)
        # == sum_j pos*(sim - log_denom) / (sum_pos + eps), exactly.
        mlpp = (sum_pos_sim[...] - sum_pos[...] * log_denom) / (sum_pos[...] + _EPS)
        loss_row = -loss_scale * mlpp
        row_v = (i * tq + lax.broadcasted_iota(jnp.int32, (tq, 1), 0)) < n_real
        out_ref[...] = jnp.where(row_v, loss_row, 0.0)   # padded rows -> 0


def _supcon_labels_kernel(row_lab_ref, col_lab_ref, a_ref, b_ref, out_ref,
                          sum_exp, sum_pos_sim, sum_pos, **static):
    def pos_weight():
        return (row_lab_ref[...] == col_lab_ref[...]).astype(jnp.float32)
    _supcon_tile(pos_weight, a_ref, b_ref, out_ref,
                 sum_exp, sum_pos_sim, sum_pos, **static)


def _supcon_mask_kernel(pos_ref, a_ref, b_ref, out_ref,
                        sum_exp, sum_pos_sim, sum_pos, **static):
    def pos_weight():
        return pos_ref[...].astype(jnp.float32)
    _supcon_tile(pos_weight, a_ref, b_ref, out_ref,
                 sum_exp, sum_pos_sim, sum_pos, **static)


def supcon_loss(features, labels=None, mask=None, *, temperature=0.07,
                contrast_mode='all', base_temperature=0.07,
                matmul_dtype=jnp.bfloat16):
    """JAX/Pallas equivalent of SupConLoss.forward (contrast_mode='all')."""
    if features.ndim < 3:
        raise ValueError('`features` needs to be [batch_size, n_views, ...]')
    if features.ndim > 3:
        features = features.reshape(features.shape[0], features.shape[1], -1)
    if contrast_mode != 'all':
        # TODO(synk): contrast_mode='one' (single anchor view) not implemented.
        raise NotImplementedError('Only contrast_mode="all" is implemented')
    if labels is not None and mask is not None:
        raise ValueError('Cannot specify both `labels` and `mask`')

    batch_size, n_views, dim = features.shape
    n_real = n_views * batch_size
    tq, tk, n_pad = _choose_tiles(n_real)
    d_pad = _round_up(dim, 128)

    # contrast_feature = torch.cat(torch.unbind(features, dim=1), dim=0)
    contrast = jnp.transpose(features, (1, 0, 2)).reshape(n_real, dim)
    contrast = jnp.pad(contrast.astype(jnp.float32),
                       ((0, n_pad - n_real), (0, d_pad - dim)))

    vmem_budget = 32 * 1024 * 1024  # fits v5e/v6e/v7x scoped VMEM limits

    # --- stage 1: normalize + fold 1/sqrt(T), cast to MXU dtype -------------
    feat_n = pl.pallas_call(
        functools.partial(_normalize_kernel,
                          inv_sqrt_temp=float(1.0 / (float(temperature) ** 0.5))),
        out_shape=jax.ShapeDtypeStruct((n_pad, d_pad), matmul_dtype),
        grid_spec=pltpu.PrefetchScalarGridSpec(
            num_scalar_prefetch=0,
            grid=(n_pad // tq,),
            in_specs=[pl.BlockSpec((tq, d_pad), lambda r: (r, 0))],
            out_specs=pl.BlockSpec((tq, d_pad), lambda r: (r, 0))),
        compiler_params=pltpu.CompilerParams(
            dimension_semantics=("parallel",),
            vmem_limit_bytes=vmem_budget),
    )(contrast)

    # --- stage 2: streamed masked log-sum-exp / masked mean -----------------
    static = dict(tq=tq, tk=tk, n_real=n_real,
                  loss_scale=float(temperature / base_temperature))
    a_spec = pl.BlockSpec((tq, d_pad), lambda i, j: (i, 0))
    b_spec = pl.BlockSpec((tk, d_pad), lambda i, j: (j, 0))
    out_spec = pl.BlockSpec((tq, 1), lambda i, j: (i, 0))
    out_shape = jax.ShapeDtypeStruct((n_pad, 1), jnp.float32)
    scratch = [pltpu.VMEM((tq, 1), jnp.float32)] * 3
    cparams = pltpu.CompilerParams(
        dimension_semantics=("parallel", "arbitrary"),
        vmem_limit_bytes=vmem_budget)
    grid = (n_pad // tq, n_pad // tk)

    if mask is None:
        # labels / eye paths: no [N, N] mask is ever materialized.
        if labels is None:
            labels_flat = jnp.arange(batch_size, dtype=jnp.int32)  # mask = eye
        else:
            labels = jnp.asarray(labels).reshape(-1, 1)
            if labels.shape[0] != batch_size:
                raise ValueError('Number of labels does not match number of features')
            labels_flat = labels.reshape(-1).astype(jnp.int32)
        lab = jnp.tile(labels_flat, n_views)                        # [N]
        lab = jnp.pad(lab, (0, n_pad - n_real), constant_values=-1)
        per_row = pl.pallas_call(
            functools.partial(_supcon_labels_kernel, **static),
            out_shape=out_shape,
            grid_spec=pltpu.PrefetchScalarGridSpec(
                num_scalar_prefetch=0, grid=grid,
                in_specs=[pl.BlockSpec((tq, 1), lambda i, j: (i, 0)),
                          pl.BlockSpec((1, tk), lambda i, j: (0, j)),
                          a_spec, b_spec],
                out_specs=out_spec,
                scratch_shapes=scratch),
            compiler_params=cparams,
        )(lab.reshape(n_pad, 1), lab.reshape(1, n_pad), feat_n, feat_n)
    else:
        # explicit-mask path: ship the tiled positive mask as bf16 (half the
        # DMA of f32); values are used as weights, matching mask.float().
        # TODO(synk): non-binary mask weights are rounded to bf16 here.
        pos = jnp.tile(jnp.asarray(mask, jnp.float32), (n_views, n_views))
        pos = jnp.pad(pos, ((0, n_pad - n_real), (0, n_pad - n_real)))
        pos = pos.astype(jnp.bfloat16)
        per_row = pl.pallas_call(
            functools.partial(_supcon_mask_kernel, **static),
            out_shape=out_shape,
            grid_spec=pltpu.PrefetchScalarGridSpec(
                num_scalar_prefetch=0, grid=grid,
                in_specs=[pl.BlockSpec((tq, tk), lambda i, j: (i, j)),
                          a_spec, b_spec],
                out_specs=out_spec,
                scratch_shapes=scratch),
            compiler_params=cparams,
        )(pos, feat_n, feat_n)

    # Padded rows are written as exactly 0 -> sum / n_real == mean over anchors.
    return jnp.sum(per_row) / n_real


def _supcon_loss_ref(features, labels=None, mask=None, *, temperature=0.07,
                     base_temperature=0.07):
    """Pure-JAX reference, mirrors the PyTorch forward (contrast_mode='all')."""
    B, V, D = features.shape
    feat = features / jnp.maximum(
        jnp.linalg.norm(features, axis=2, keepdims=True), 1e-8)
    if labels is None and mask is None:
        mask = jnp.eye(B, dtype=jnp.float32)
    elif labels is not None:
        labels = labels.reshape(-1, 1)
        mask = (labels == labels.T).astype(jnp.float32)
    else:
        mask = mask.astype(jnp.float32)
    cf = jnp.transpose(feat, (1, 0, 2)).reshape(V * B, D)
    sim = jnp.clip(cf @ cf.T / temperature, -20.0, 20.0)
    mask = jnp.tile(mask, (V, V))
    lm = 1.0 - jnp.eye(V * B)
    mask = mask * lm
    exp_sim = jnp.exp(sim) * lm
    log_prob = sim - jnp.log(exp_sim.sum(1, keepdims=True) + 1e-8)
    mlpp = (mask * log_prob).sum(1) / (mask.sum(1) + 1e-8)
    return jnp.mean(-(temperature / base_temperature) * mlpp)


if __name__ == "__main__":
    key = jax.random.PRNGKey(0)
    batch, n_views, dim = 4, 2, 32
    features = jax.random.normal(key, (batch, n_views, dim), dtype=jnp.float32)
    labels = jnp.array([0, 1, 0, 1], dtype=jnp.int32)

    # supervised (labels) path, bf16 MXU inputs (default fast path)
    loss_bf16 = jax.block_until_ready(supcon_loss(features, labels=labels))
    ref_lab = _supcon_loss_ref(features, labels=labels)
    assert jnp.allclose(loss_bf16, ref_lab, atol=5e-2, rtol=5e-2), (loss_bf16, ref_lab)

    # supervised path, f32 MXU inputs (tighter numerical check)
    loss_f32 = jax.block_until_ready(
        supcon_loss(features, labels=labels, matmul_dtype=jnp.float32))
    assert jnp.allclose(loss_f32, ref_lab, atol=1e-3, rtol=1e-3), (loss_f32, ref_lab)

    # unsupervised (eye-mask / SimCLR) path
    loss_eye = jax.block_until_ready(
        supcon_loss(features, matmul_dtype=jnp.float32))
    ref_eye = _supcon_loss_ref(features)
    assert jnp.allclose(loss_eye, ref_eye, atol=1e-3, rtol=1e-3), (loss_eye, ref_eye)

    # explicit positive-pair mask path
    user_mask = (labels[:, None] == labels[None, :]).astype(jnp.float32)
    loss_msk = jax.block_until_ready(
        supcon_loss(features, mask=user_mask, matmul_dtype=jnp.float32))
    ref_msk = _supcon_loss_ref(features, mask=user_mask)
    assert jnp.allclose(loss_msk, ref_msk, atol=1e-3, rtol=1e-3), (loss_msk, ref_msk)

    print("KERNEL_OK")
</pallas_src>

<mosaic_0001>
module attributes {stable_mosaic.version = 11 : i64} {
  func.func @_normalize_kernel(%arg0: i32, %arg1: memref<128x128xf32, #tpu.memory_space<vmem>>, %arg2: memref<128x128xbf16, #tpu.memory_space<vmem>>) attributes {dimension_semantics = [#tpu.dimension_semantics<parallel>], iteration_bounds = array<i64: 1>, scalar_prefetch = 0 : i64, scratch_operands = 0 : i64, tpu.core_type = #tpu.core_type<tc>, window_params = [{transform_indices = @transform_0, window_bounds = array<i64: 128, 128>}, {transform_indices = @transform_1, window_bounds = array<i64: 128, 128>}]} {
    %c0 = arith.constant 0 : index
    %c0_0 = arith.constant 0 : index
    %0 = vector.load %arg1[%c0, %c0_0] : memref<128x128xf32, #tpu.memory_space<vmem>>, vector<128x128xf32>
    %1 = arith.mulf %0, %0 : vector<128x128xf32>
    %cst = arith.constant dense<0.000000e+00> : vector<128xf32>
    %2 = vector.multi_reduction <add>, %1, %cst [1] : vector<128x128xf32> to vector<128xf32>
    %3 = vector.shape_cast %2 : vector<128xf32> to vector<128x1xf32>
    %cst_1 = arith.constant 1.000000e-16 : f32
    %4 = vector.broadcast %cst_1 : f32 to vector<128x1xf32>
    %5 = arith.maximumf %3, %4 : vector<128x1xf32>
    %6 = math.rsqrt %5 : vector<128x1xf32>
    %cst_2 = arith.constant 3.77964473 : f32
    %7 = vector.broadcast %cst_2 : f32 to vector<128x1xf32>
    %8 = arith.mulf %6, %7 : vector<128x1xf32>
    %9 = vector.broadcast %8 : vector<128x1xf32> to vector<128x128xf32>
    %10 = arith.mulf %0, %9 : vector<128x128xf32>
    %11 = arith.truncf %10 : vector<128x128xf32> to vector<128x128xbf16>
    %c0_3 = arith.constant 0 : index
    %c0_4 = arith.constant 0 : index
    %12 = vector.load %arg2[%c0_3, %c0_4] : memref<128x128xbf16, #tpu.memory_space<vmem>>, vector<128x128xbf16>
    tpu.vector_store %arg2[%c0_3, %c0_4], %11 {strides = array<i32>} : memref<128x128xbf16, #tpu.memory_space<vmem>>, vector<128x128xbf16>,
    return
  }
  func.func @transform_0(%arg0: i32) -> (i32, i32) {
    %c0_i32 = arith.constant 0 : i32
    %c0_i32_0 = arith.constant 0 : i32
    return %arg0, %c0_i32 : i32, i32
  }
  func.func @transform_1(%arg0: i32) -> (i32, i32) {
    %c0_i32 = arith.constant 0 : i32
    %c0_i32_0 = arith.constant 0 : i32
    return %arg0, %c0_i32 : i32, i32
  }
}

</mosaic_0001>

<llo_original>
// kernel: tpu_custom_call.1
$region0: #{tpu_custom_call.1}
  #allocation0 [shape = 'u32[]', space=smem, size = 0x4, offset = 0x4, fixed_abs, tag = 'smem constant byte address 0x4 - core index']
  #allocation1 [shape = 'u32[144,128]{1,0:T(1,128)}', space=vmem, size = 0x12000, scoped, tag = 'internal scratch']
  %s0 = inlined_call_operand.hbm [shape: f32[128,128], index: 0, kind: input, shape index: {}]
  %s1 = inlined_call_operand.hbm [shape: bf16[128,128], index: 1, kind: output, shape index: {}]
  %s2 = sld [smem:[#allocation0]]
  $region18: #{tpu_custom_call.1} parent=0
    _
  %s4 = ssub.s32 1, %s2
  %s5 = scalar_select 0, %s4, %s2
  $region1: #{tpu_custom_call.1} parent=0
    #allocation2 [shape = 'u8[65536]{0}', space=vmem, size = 0x10000, scoped, tag = 'input window, operand 0, single buffered']
    #allocation3 [shape = 's32[1]{0}', space=sflag, size = 0x4, scoped, tag = 'scoped memory for tpu_custom_call.1']
    #allocation4 [shape = 's32[1]{0}', space=sflag, size = 0x4, scoped, tag = 'scoped memory for tpu_custom_call.1']
    #allocation5 [shape = 'u8[32768]{0}', space=vmem, size = 0x8000, scoped, tag = 'output window, operand 0, single buffered']
    %6 = vsyncpa [#allocation3], 0
    %7 = vsyncpa [#allocation4], 0
    // Predicated region
    $region2: #{tpu_custom_call.1} parent=1 // pred_check
      _
    $region3: #{tpu_custom_call.1} parent=1 // pred_check_branch
      %9 = sbr.rel (0) target = $region5
    $region4: #{tpu_custom_call.1} parent=1 // pred_region
      %s11 = ssub.s32 2048, 2048
      %12 = vsyncadd [#allocation3], %s11
      %s13 = sshll.u32 [#allocation2], 4
      %s14 = int_to_ptr.vmem [resolvable:$true] %s13
      %19 = dma.hbm_to_vmem [thread:$0]  %s0, 2048, %s14, [#allocation3], 128, 128, 8
    $region5: #{tpu_custom_call.1} parent=1 // pred_fallthru
      _
    // Predicated region
    $region6: #{tpu_custom_call.1} parent=1 // pred_check
      _
    $region7: #{tpu_custom_call.1} parent=1 // pred_check_branch
      %21 = sbr.rel (0) target = $region9
    $region8: #{tpu_custom_call.1} parent=1 // pred_region
      %22 = dma.done [#allocation3], 2048
    $region9: #{tpu_custom_call.1} parent=1 // pred_fallthru
      _
    %v23 = vld [vmem:[#allocation2] sm:$0xff]
    %v24 = vld [vmem:[#allocation2 + $0x8] sm:$0xff]
    %v25 = vld [vmem:[#allocation2 + $0x10] sm:$0xff]
    %v26 = vld [vmem:[#allocation2 + $0x18] sm:$0xff]
    %v27 = vld [vmem:[#allocation2 + $0x20] sm:$0xff]
    %v28 = vld [vmem:[#allocation2 + $0x28] sm:$0xff]
    %v29 = vld [vmem:[#allocation2 + $0x30] sm:$0xff]
    %v30 = vld [vmem:[#allocation2 + $0x38] sm:$0xff]
    %v31 = vld [vmem:[#allocation2 + $0x40] sm:$0xff]
    %v32 = vld [vmem:[#allocation2 + $0x48] sm:$0xff]
    %v33 = vld [vmem:[#allocation2 + $0x50] sm:$0xff]
    %v34 = vld [vmem:[#allocation2 + $0x58] sm:$0xff]
    %v35 = vld [vmem:[#allocation2 + $0x60] sm:$0xff]
    %v36 = vld [vmem:[#allocation2 + $0x68] sm:$0xff]
    %v37 = vld [vmem:[#allocation2 + $0x70] sm:$0xff]
    %v38 = vld [vmem:[#allocation2 + $0x78] sm:$0xff]
    %v39 = vmul.f32 %v23, %v23
    %v40 = vmul.f32 %v24, %v24
    %v41 = vmul.f32 %v25, %v25
    %v42 = vmul.f32 %v26, %v26
    %v43 = vmul.f32 %v27, %v27
    %v44 = vmul.f32 %v28, %v28
    %v45 = vmul.f32 %v29, %v29
    %v46 = vmul.f32 %v30, %v30
    %v47 = vmul.f32 %v31, %v31
    %v48 = vmul.f32 %v32, %v32
    %v49 = vmul.f32 %v33, %v33
    %v50 = vmul.f32 %v34, %v34
    %v51 = vmul.f32 %v35, %v35
    %v52 = vmul.f32 %v36, %v36
    %v53 = vmul.f32 %v37, %v37
    %v54 = vmul.f32 %v38, %v38
    %55 = vadd.xlane.f32.xlu0 %v39
    %v56 = vpop.xlane.xlu0 %55
    %57 = vadd.xlane.f32.xlu0 %v40
    %v58 = vpop.xlane.xlu0 %57
    %59 = vadd.xlane.f32.xlu0 %v41
    %v60 = vpop.xlane.xlu0 %59
    %61 = vadd.xlane.f32.xlu0 %v42
    %v62 = vpop.xlane.xlu0 %61
    %63 = vadd.xlane.f32.xlu0 %v43
    %v64 = vpop.xlane.xlu0 %63
    %65 = vadd.xlane.f32.xlu0 %v44
    %v66 = vpop.xlane.xlu0 %65
    %67 = vadd.xlane.f32.xlu0 %v45
    %v68 = vpop.xlane.xlu0 %67
    %69 = vadd.xlane.f32.xlu0 %v46
    %v70 = vpop.xlane.xlu0 %69
    %71 = vadd.xlane.f32.xlu0 %v47
    %v72 = vpop.xlane.xlu0 %71
    %73 = vadd.xlane.f32.xlu0 %v48
    %v74 = vpop.xlane.xlu0 %73
    %75 = vadd.xlane.f32.xlu0 %v49
    %v76 = vpop.xlane.xlu0 %75
    %77 = vadd.xlane.f32.xlu0 %v50
    %v78 = vpop.xlane.xlu0 %77
    %79 = vadd.xlane.f32.xlu0 %v51
    %v80 = vpop.xlane.xlu0 %79
    %81 = vadd.xlane.f32.xlu0 %v52
    %v82 = vpop.xlane.xlu0 %81
    %83 = vadd.xlane.f32.xlu0 %v53
    %v84 = vpop.xlane.xlu0 %83
    %85 = vadd.xlane.f32.xlu0 %v54
    %v86 = vpop.xlane.xlu0 %85
    %v87 = vmax.f32 %v56, 1e-16
    %v88 = vmax.f32 %v58, 1e-16
    %v89 = vmax.f32 %v60, 1e-16
    %v90 = vmax.f32 %v62, 1e-16
    %v91 = vmax.f32 %v64, 1e-16
    %v92 = vmax.f32 %v66, 1e-16
    %v93 = vmax.f32 %v68, 1e-16
    %v94 = vmax.f32 %v70, 1e-16
    %v95 = vmax.f32 %v72, 1e-16
    %v96 = vmax.f32 %v74, 1e-16
    %v97 = vmax.f32 %v76, 1e-16
    %v98 = vmax.f32 %v78, 1e-16
    %v99 = vmax.f32 %v80, 1e-16
    %v100 = vmax.f32 %v82, 1e-16
    %v101 = vmax.f32 %v84, 1e-16
    %v102 = vmax.f32 %v86, 1e-16
    %v103 = vrsqrt.pop %v87
    %v104 = vrsqrt.pop %v88
    %v105 = vrsqrt.pop %v89
    %v106 = vrsqrt.pop %v90
    %v107 = vrsqrt.pop %v91
    %v108 = vrsqrt.pop %v92
    %v109 = vrsqrt.pop %v93
    %v110 = vrsqrt.pop %v94
    %v111 = vrsqrt.pop %v95
    %v112 = vrsqrt.pop %v96
    %v113 = vrsqrt.pop %v97
    %v114 = vrsqrt.pop %v98
    %v115 = vrsqrt.pop %v99
    %v116 = vrsqrt.pop %v100
    %v117 = vrsqrt.pop %v101
    %v118 = vrsqrt.pop %v102
    %v119 = vmul.f32 %v103, 3.7796447
    %v120 = vmul.f32 %v104, 3.7796447
    %v121 = vmul.f32 %v105, 3.7796447
    %v122 = vmul.f32 %v106, 3.7796447
    %v123 = vmul.f32 %v107, 3.7796447
    %v124 = vmul.f32 %v108, 3.7796447
    %v125 = vmul.f32 %v109, 3.7796447
    %v126 = vmul.f32 %v110, 3.7796447
    %v127 = vmul.f32 %v111, 3.7796447
    %v128 = vmul.f32 %v112, 3.7796447
    %v129 = vmul.f32 %v113, 3.7796447
    %v130 = vmul.f32 %v114, 3.7796447
    %v131 = vmul.f32 %v115, 3.7796447
    %v132 = vmul.f32 %v116, 3.7796447
    %v133 = vmul.f32 %v117, 3.7796447
    %v134 = vmul.f32 %v118, 3.7796447
    %v135 = vmul.f32 %v23, %v119
    %v136 = vmul.f32 %v24, %v120
    %v137 = vmul.f32 %v25, %v121
    %v138 = vmul.f32 %v26, %v122
    %v139 = vmul.f32 %v27, %v123
    %v140 = vmul.f32 %v28, %v124
    %v141 = vmul.f32 %v29, %v125
    %v142 = vmul.f32 %v30, %v126
    %v143 = vmul.f32 %v31, %v127
    %v144 = vmul.f32 %v32, %v128
    %v145 = vmul.f32 %v33, %v129
    %v146 = vmul.f32 %v34, %v130
    %v147 = vmul.f32 %v35, %v131
    %v148 = vmul.f32 %v36, %v132
    %v149 = vmul.f32 %v37, %v133
    %v150 = vmul.f32 %v38, %v134
    %v151 = vpack.c.bf16 %v136, %v135
    %v152 = vpack.c.bf16 %v138, %v137
    %v153 = vpack.c.bf16 %v140, %v139
    %v154 = vpack.c.bf16 %v142, %v141
    %v155 = vpack.c.bf16 %v144, %v143
    %v156 = vpack.c.bf16 %v146, %v145
    %v157 = vpack.c.bf16 %v148, %v147
    %v158 = vpack.c.bf16 %v150, %v149
    %v167 = vunpack.c.l.b16 %v151
    %v168 = vunpack.c.h.b16 %v151
    %v169 = vunpack.c.l.b16 %v152
    %v170 = vunpack.c.h.b16 %v152
    %v171 = vunpack.c.l.b16 %v153
    %v172 = vunpack.c.h.b16 %v153
    %v173 = vunpack.c.l.b16 %v154
    %v174 = vunpack.c.h.b16 %v154
    %v175 = vunpack.c.l.b16 %v155
    %v176 = vunpack.c.h.b16 %v155
    %v177 = vunpack.c.l.b16 %v156
    %v178 = vunpack.c.h.b16 %v156
    %v179 = vunpack.c.l.b16 %v157
    %v180 = vunpack.c.h.b16 %v157
    %v181 = vunpack.c.l.b16 %v158
    %v182 = vunpack.c.h.b16 %v158
    %v183 = vpack.c.b16 %v167, %v167
    %v184 = vpack.c.b16 %v168, %v168
    %v185 = vpack.c.b16 %v169, %v169
    %v186 = vpack.c.b16 %v170, %v170
    %v187 = vpack.c.b16 %v171, %v171
    %v188 = vpack.c.b16 %v172, %v172
    %v189 = vpack.c.b16 %v173, %v173
    %v190 = vpack.c.b16 %v174, %v174
    %v191 = vpack.c.b16 %v175, %v175
    %v192 = vpack.c.b16 %v176, %v176
    %v193 = vpack.c.b16 %v177, %v177
    %v194 = vpack.c.b16 %v178, %v178
    %v195 = vpack.c.b16 %v179, %v179
    %v196 = vpack.c.b16 %v180, %v180
    %v197 = vpack.c.b16 %v181, %v181
    %v198 = vpack.c.b16 %v182, %v182
    %215 = vst [vmem:[#allocation5] sm:$0xf] %v183
    %216 = vst [vmem:[#allocation5 + $0x4] sm:$0xf] %v184
    %217 = vst [vmem:[#allocation5 + $0x8] sm:$0xf] %v185
    %218 = vst [vmem:[#allocation5 + $0xc] sm:$0xf] %v186
    %219 = vst [vmem:[#allocation5 + $0x10] sm:$0xf] %v187
    %220 = vst [vmem:[#allocation5 + $0x14] sm:$0xf] %v188
    %221 = vst [vmem:[#allocation5 + $0x18] sm:$0xf] %v189
    %222 = vst [vmem:[#allocation5 + $0x1c] sm:$0xf] %v190
    %223 = vst [vmem:[#allocation5 + $0x20] sm:$0xf] %v191
    %224 = vst [vmem:[#allocation5 + $0x24] sm:$0xf] %v192
    %225 = vst [vmem:[#allocation5 + $0x28] sm:$0xf] %v193
    %226 = vst [vmem:[#allocation5 + $0x2c] sm:$0xf] %v194
    %227 = vst [vmem:[#allocation5 + $0x30] sm:$0xf] %v195
    %228 = vst [vmem:[#allocation5 + $0x34] sm:$0xf] %v196
    %229 = vst [vmem:[#allocation5 + $0x38] sm:$0xf] %v197
    %230 = vst [vmem:[#allocation5 + $0x3c] sm:$0xf] %v198
    // Predicated region
    $region10: #{tpu_custom_call.1} parent=1 // pred_check
      _
    $region11: #{tpu_custom_call.1} parent=1 // pred_check_branch
      %232 = sbr.rel (0) target = $region13
    $region12: #{tpu_custom_call.1} parent=1 // pred_region
      %s234 = ssub.s32 1024, 1024
      %235 = vsyncadd [#allocation4], %s234
      %s236 = sshll.u32 [#allocation5], 4
      %s237 = int_to_ptr.vmem [resolvable:$true] %s236
      %242 = dma.vmem_to_hbm [thread:$0]  %s237, 1024, %s1, [#allocation4], 64, 64, 4
    $region13: #{tpu_custom_call.1} parent=1 // pred_fallthru
      _
    // Predicated region
    $region14: #{tpu_custom_call.1} parent=1 // pred_check
      _
    $region15: #{tpu_custom_call.1} parent=1 // pred_check_branch
      %244 = sbr.rel (0) target = $region17
    $region16: #{tpu_custom_call.1} parent=1 // pred_region
      %245 = dma.done [#allocation4], 1024
    $region17: #{tpu_custom_call.1} parent=1 // pred_fallthru
      _
    %246 = vsyncpa [#allocation3], 1
    %247 = vsyncpa [#allocation4], 1

</llo_original>
